<compile_context>
chip_gen: v6e
topology: v6e:2x2x1
jax: 0.10.0
libtpu: 0.0.40
codegen_flags: <defaults>
</compile_context>

<pallas_src>
import jax
import jax.numpy as jnp
from jax.experimental import pallas as pl
from jax.experimental.pallas import tpu as pltpu

# ---------------- small ChatGLM-like config ----------------
HIDDEN = 64
NUM_HEADS = 4
NUM_KV_HEADS = 2                      # multi_query_attention, multi_query_group_num=2
HEAD_DIM = HIDDEN // NUM_HEADS        # 16
Q_SIZE = NUM_HEADS * HEAD_DIM         # 64
KV_SIZE = NUM_KV_HEADS * HEAD_DIM     # 32
QKV_SIZE = Q_SIZE + 2 * KV_SIZE       # 128
ROTARY_DIM = HEAD_DIM // 2            # 8   (rotary_dim = head_dim // 2)
GROUP = NUM_HEADS // NUM_KV_HEADS     # query heads per kv head
SEQ = 16
TQ = 8                                # q-token tile (grid axis, "parallel")
SCALING = HEAD_DIM ** -0.5
ROPE_BASE = 10000.0                   # base = 10000 * rope_ratio (rope_ratio = 1.0)
MASK_VALUE = -1e30


# ---------------- fused Pallas kernel ----------------
def _glm_attention_kernel(x_ref, w_qkv_ref, b_qkv_ref, perm_ref, cos_ref, sin_ref,
                          w_dense_ref, o_ref, ctx_ref):
    tq = o_ref.shape[0]                       # query-token tile
    t = x_ref.shape[0]                        # full sequence (keys / values)
    q_start = pl.multiple_of(pl.program_id(0) * tq, tq)

    w_qkv = w_qkv_ref[...]                    # (HIDDEN, QKV_SIZE) bf16, resident
    bias = b_qkv_ref[...]                     # (1, QKV_SIZE) f32

    # ---- K / V projection for all tokens (this causal q tile needs them all) ----
    # TODO(synk): at real sizes compute K/V once (flash-style kv grid axis + cache)
    #             instead of per q-tile.
    x_all = x_ref[...]                                          # (T, HIDDEN) bf16
    kv = jnp.dot(x_all, w_qkv[:, Q_SIZE:],
                 preferred_element_type=jnp.float32) + bias[:, Q_SIZE:]
    k = kv[:, :KV_SIZE]                                         # (T, KV_SIZE) f32
    v = kv[:, KV_SIZE:].astype(jnp.bfloat16)                    # (T, KV_SIZE) bf16

    # ---- Q projection for this tile only ----
    x_tile = x_ref[pl.ds(q_start, tq), :]                       # (TQ, HIDDEN) bf16
    q = jnp.dot(x_tile, w_qkv[:, :Q_SIZE],
                preferred_element_type=jnp.float32) + bias[:, :Q_SIZE]

    # ---- GPT-J interleaved RoPE (rotary_dim = HEAD_DIM // 2), fully fused ----
    #   out = x * cosF + swap_adjacent_lanes(x) * sinF
    # cosF/sinF are per-(token, lane) tables built in the wrapper from
    # position_ids only (1 / 0 on pass-through lanes).  The adjacent-lane swap is
    # a static bf16 permutation matrix hoisted out of the kernel (MXU matmul).
    # At real head_dim=128, prefer pltpu.roll within the aligned 128-lane head.
    cos_q = cos_ref[pl.ds(q_start, tq), :]                      # (TQ, Q_SIZE) f32
    sin_q = sin_ref[pl.ds(q_start, tq), :]
    perm = perm_ref[...]                                        # (Q_SIZE, Q_SIZE) bf16
    swap_q = jnp.dot(q.astype(jnp.bfloat16), perm,
                     preferred_element_type=jnp.float32)
    q = q * cos_q + swap_q * sin_q
    q = q * SCALING                    # fold softmax scaling into q once (not TxT)

    cos_all = cos_ref[...]
    sin_all = sin_ref[...]
    swap_k = jnp.dot(k.astype(jnp.bfloat16), perm[:KV_SIZE, :KV_SIZE],
                     preferred_element_type=jnp.float32)
    k = (k * cos_all[:, :KV_SIZE] + swap_k * sin_all[:, :KV_SIZE]
         ).astype(jnp.bfloat16)                                 # (T, KV_SIZE) bf16

    # ---- causal GQA attention: one batched score/PV matmul pair per kv head ----
    # The GROUP query heads sharing a kv head are stacked along rows (head-major):
    # LHS = (GROUP*TQ, HEAD_DIM) -> NUM_KV_HEADS matmul pairs instead of NUM_HEADS.
    rows = jax.lax.broadcasted_iota(jnp.int32, (GROUP * tq, t), 0)
    cols = jax.lax.broadcasted_iota(jnp.int32, (GROUP * tq, t), 1)
    q_pos = jnp.bitwise_and(rows, tq - 1) + q_start             # TQ is a power of 2
    causal = cols <= q_pos

    for g in range(NUM_KV_HEADS):
        qg = jnp.concatenate(
            [q[:, (g * GROUP + j) * HEAD_DIM:(g * GROUP + j + 1) * HEAD_DIM]
             for j in range(GROUP)], axis=0).astype(jnp.bfloat16)   # (G*TQ, D)
        kg = k[:, g * HEAD_DIM:(g + 1) * HEAD_DIM]                  # (T, D) bf16
        vg = v[:, g * HEAD_DIM:(g + 1) * HEAD_DIM]                  # (T, D) bf16

        # contract last dims directly -> no explicit K transpose / XLU relayout
        s = jax.lax.dot_general(qg, kg, (((1,), (1,)), ((), ())),
                                preferred_element_type=jnp.float32)  # (G*TQ, T)
        s = jnp.where(causal, s, MASK_VALUE)                         # f32 softmax
        m = jnp.max(s, axis=-1, keepdims=True)
        p = jnp.exp(s - m)
        l = jnp.sum(p, axis=-1, keepdims=True)
        ctx = jnp.dot(p.astype(jnp.bfloat16), vg,
                      preferred_element_type=jnp.float32)            # (G*TQ, D)
        ctx = ctx * pl.reciprocal(l, approx=True)                    # EUP vrcp
        # per-head lane-slice stores into the VMEM scratch (no list + concat)
        for j in range(GROUP):
            h = g * GROUP + j
            ctx_ref[:, h * HEAD_DIM:(h + 1) * HEAD_DIM] = ctx[j * tq:(j + 1) * tq, :]

    # ---- output projection (RowParallelLinear, add_bias_linear=False) ----
    # NOTE: at this toy config the output slab is only 64 lanes (masked stores);
    # at real HIDDEN=4096 it is lane-dense.
    o_ref[...] = jnp.dot(ctx_ref[...].astype(jnp.bfloat16), w_dense_ref[...],
                         preferred_element_type=jnp.float32)


# ---------------- load-time static helpers (run ONCE, outside jit) ----------------
def make_swap_perm():
    """Static adjacent-lane swap permutation for GPT-J interleaved RoPE (bf16)."""
    row = jnp.arange(Q_SIZE)
    col = jnp.arange(Q_SIZE)
    return (col[None, :] == (row[:, None] ^ 1)).astype(jnp.bfloat16)


def _rope_lane_tables(position_ids):
    """Per-(token, lane-in-q-slab) cos/sin factors for GPT-J interleaved RoPE.
    Width Q_SIZE; the first KV_SIZE lanes double as the K-slab table because the
    lane pattern repeats every HEAD_DIM.  Depends only on position_ids."""
    pos = position_ids.astype(jnp.float32)
    inv_freq = 1.0 / (ROPE_BASE ** (
        jnp.arange(0, ROTARY_DIM, 2, dtype=jnp.float32) / ROTARY_DIM))
    freqs = pos[:, None] * inv_freq[None, :]                 # (T, ROTARY_DIM//2)
    cos = jnp.cos(freqs)
    sin = jnp.sin(freqs)
    lane = jnp.arange(Q_SIZE)
    lane_in_head = lane % HEAD_DIM
    pair = jnp.minimum(lane_in_head // 2, ROTARY_DIM // 2 - 1)
    is_rot = lane_in_head < ROTARY_DIM
    is_odd = (lane_in_head % 2) == 1
    cos_l = cos[:, pair]                                     # (T, Q_SIZE)
    sin_l = sin[:, pair]
    cos_full = jnp.where(is_rot[None, :], cos_l, 1.0)
    sin_full = jnp.where(is_rot[None, :],
                         jnp.where(is_odd[None, :], sin_l, -sin_l), 0.0)
    return cos_full.astype(jnp.float32), sin_full.astype(jnp.float32)


# ---------------- full GLMAttention forward (single pallas_call) ----------------
@jax.jit
def glm_attention(hidden_states, position_ids, w_qkv, b_qkv, w_dense, swap_perm):
    """Expects bf16 hidden_states / w_qkv / w_dense (cast once at load time)."""
    t, hidden = hidden_states.shape
    assert hidden == HIDDEN
    assert t % TQ == 0 and (TQ & (TQ - 1)) == 0      # TODO(synk): pad ragged T
    assert hidden_states.dtype == jnp.bfloat16
    assert w_qkv.dtype == jnp.bfloat16 and w_dense.dtype == jnp.bfloat16
    if b_qkv.ndim == 1:
        b_qkv = b_qkv.reshape(1, QKV_SIZE)
    b_qkv = b_qkv.astype(jnp.float32)
    cos_t, sin_t = _rope_lane_tables(position_ids)   # position-only, (T, Q_SIZE)

    return pl.pallas_call(
        _glm_attention_kernel,
        out_shape=jax.ShapeDtypeStruct((t, HIDDEN), jnp.float32),
        grid_spec=pltpu.PrefetchScalarGridSpec(
            num_scalar_prefetch=0,
            grid=(t // TQ,),
            in_specs=[
                pl.BlockSpec((t, HIDDEN), lambda i: (0, 0)),         # x (resident)
                pl.BlockSpec((HIDDEN, QKV_SIZE), lambda i: (0, 0)),  # w_qkv bf16
                pl.BlockSpec((1, QKV_SIZE), lambda i: (0, 0)),       # qkv bias f32
                pl.BlockSpec((Q_SIZE, Q_SIZE), lambda i: (0, 0)),    # RoPE swap perm
                pl.BlockSpec((t, Q_SIZE), lambda i: (0, 0)),         # RoPE cos table
                pl.BlockSpec((t, Q_SIZE), lambda i: (0, 0)),         # RoPE sin table
                pl.BlockSpec((Q_SIZE, HIDDEN), lambda i: (0, 0)),    # w_dense bf16
            ],
            out_specs=pl.BlockSpec((TQ, HIDDEN), lambda i: (i, 0)),
            scratch_shapes=[pltpu.VMEM((TQ, Q_SIZE), jnp.float32)],  # ctx staging
        ),
        # q-tile axis is independent -> megacore / v7x 2-TC sharding.
        compiler_params=pltpu.CompilerParams(
            dimension_semantics=("parallel",)),
    )(hidden_states, w_qkv, b_qkv, swap_perm, cos_t, sin_t, w_dense)


# ---------------- pure-JAX reference (f32) for a sanity check ----------------
def _reference_forward(hidden_states, position_ids, w_qkv, b_qkv, w_dense):
    hs = hidden_states.astype(jnp.float32)
    w_qkv = w_qkv.astype(jnp.float32)
    w_dense = w_dense.astype(jnp.float32)
    b = jnp.asarray(b_qkv, jnp.float32).reshape(-1)
    t = hs.shape[0]
    qkv = hs @ w_qkv + b[None, :]
    q = qkv[:, :Q_SIZE].reshape(t, NUM_HEADS, HEAD_DIM)
    k = qkv[:, Q_SIZE:Q_SIZE + KV_SIZE].reshape(t, NUM_KV_HEADS, HEAD_DIM)
    v = qkv[:, Q_SIZE + KV_SIZE:].reshape(t, NUM_KV_HEADS, HEAD_DIM)
    inv_freq = 1.0 / (ROPE_BASE ** (
        jnp.arange(0, ROTARY_DIM, 2, dtype=jnp.float32) / ROTARY_DIM))
    freqs = position_ids.astype(jnp.float32)[:, None] * inv_freq[None, :]
    cos = jnp.cos(freqs)[:, None, :]
    sin = jnp.sin(freqs)[:, None, :]

    def rot(xv):
        xr, xp = xv[..., :ROTARY_DIM], xv[..., ROTARY_DIM:]
        x1, x2 = xr[..., 0::2], xr[..., 1::2]
        o1 = x1 * cos - x2 * sin
        o2 = x2 * cos + x1 * sin
        xr = jnp.stack([o1, o2], axis=-1).reshape(xr.shape)
        return jnp.concatenate([xr, xp], axis=-1)

    q, k = rot(q), rot(k)
    k = jnp.repeat(k, GROUP, axis=1)
    v = jnp.repeat(v, GROUP, axis=1)
    s = jnp.einsum("tnd,snd->nts", q, k) * SCALING
    mask = jnp.tril(jnp.ones((t, t), dtype=bool))
    s = jnp.where(mask[None], s, -jnp.inf)
    p = jax.nn.softmax(s, axis=-1)
    ctx = jnp.einsum("nts,snd->tnd", p, v).reshape(t, Q_SIZE)
    return ctx @ w_dense


if __name__ == "__main__":
    key = jax.random.PRNGKey(0)
    k1, k2, k3, k4 = jax.random.split(key, 4)
    hidden_states = jax.random.normal(k1, (SEQ, HIDDEN), dtype=jnp.float32)
    w_qkv = jax.random.normal(k2, (HIDDEN, QKV_SIZE), dtype=jnp.float32) * 0.02
    b_qkv = jax.random.normal(k3, (QKV_SIZE,), dtype=jnp.float32) * 0.02
    w_dense = jax.random.normal(k4, (Q_SIZE, HIDDEN), dtype=jnp.float32) * 0.02
    position_ids = jnp.arange(SEQ, dtype=jnp.int32)

    # One-time ("load time") parameter prep: bf16 weights + bf16 activations +
    # static RoPE swap permutation.  Done OUTSIDE the jitted call, so there is no
    # per-call f32->bf16 HBM round-trip (perf review items 1 & 2).
    hs_bf16 = hidden_states.astype(jnp.bfloat16)
    w_qkv_bf16 = w_qkv.astype(jnp.bfloat16)
    w_dense_bf16 = w_dense.astype(jnp.bfloat16)
    b_qkv_2d = b_qkv.reshape(1, QKV_SIZE).astype(jnp.float32)
    swap_perm = make_swap_perm()

    out = glm_attention(hs_bf16, position_ids, w_qkv_bf16, b_qkv_2d,
                        w_dense_bf16, swap_perm)
    jax.block_until_ready(out)
    assert out.shape == (SEQ, HIDDEN) and out.dtype == jnp.float32

    ref = _reference_forward(hs_bf16, position_ids, w_qkv_bf16, b_qkv_2d,
                             w_dense_bf16)
    err = float(jnp.max(jnp.abs(out - ref)))
    assert jnp.allclose(out, ref, rtol=2e-2, atol=3e-3), "max abs err = %e" % err
    print("KERNEL_OK")
</pallas_src>

<mosaic_0001>
module attributes {stable_mosaic.version = 11 : i64} {
  func.func @_glm_attention_kernel(%arg0: i32, %arg1: memref<16x64xbf16, #tpu.memory_space<vmem>>, %arg2: memref<64x128xbf16, #tpu.memory_space<vmem>>, %arg3: memref<1x128xf32, #tpu.memory_space<vmem>>, %arg4: memref<64x64xbf16, #tpu.memory_space<vmem>>, %arg5: memref<16x64xf32, #tpu.memory_space<vmem>>, %arg6: memref<16x64xf32, #tpu.memory_space<vmem>>, %arg7: memref<64x64xbf16, #tpu.memory_space<vmem>>, %arg8: memref<8x64xf32, #tpu.memory_space<vmem>>, %arg9: memref<8x64xf32, #tpu.memory_space<vmem>>) attributes {dimension_semantics = [#tpu.dimension_semantics<parallel>], iteration_bounds = array<i64: 2>, scalar_prefetch = 0 : i64, scratch_operands = 1 : i64, tpu.core_type = #tpu.core_type<tc>, window_params = [{pipeline_mode = #tpu.pipeline_mode<synchronous>, transform_indices = @transform_0, window_bounds = array<i64: 16, 64>}, {pipeline_mode = #tpu.pipeline_mode<synchronous>, transform_indices = @transform_1, window_bounds = array<i64: 64, 128>}, {pipeline_mode = #tpu.pipeline_mode<synchronous>, transform_indices = @transform_2, window_bounds = array<i64: 1, 128>}, {pipeline_mode = #tpu.pipeline_mode<synchronous>, transform_indices = @transform_3, window_bounds = array<i64: 64, 64>}, {pipeline_mode = #tpu.pipeline_mode<synchronous>, transform_indices = @transform_4, window_bounds = array<i64: 16, 64>}, {pipeline_mode = #tpu.pipeline_mode<synchronous>, transform_indices = @transform_5, window_bounds = array<i64: 16, 64>}, {pipeline_mode = #tpu.pipeline_mode<synchronous>, transform_indices = @transform_6, window_bounds = array<i64: 64, 64>}, {transform_indices = @transform_7, window_bounds = array<i64: 8, 64>}]} {
    %c8_i32 = arith.constant 8 : i32
    %0 = arith.muli %arg0, %c8_i32 : i32
    %1 = tpu.assume_multiple %0, 8 : i32
    %c0 = arith.constant 0 : index
    %c0_0 = arith.constant 0 : index
    %2 = vector.load %arg2[%c0, %c0_0] : memref<64x128xbf16, #tpu.memory_space<vmem>>, vector<64x128xbf16>
    %c0_1 = arith.constant 0 : index
    %c0_2 = arith.constant 0 : index
    %3 = vector.load %arg3[%c0_1, %c0_2] : memref<1x128xf32, #tpu.memory_space<vmem>>, vector<1x128xf32>
    %c0_3 = arith.constant 0 : index
    %c0_4 = arith.constant 0 : index
    %4 = vector.load %arg1[%c0_3, %c0_4] : memref<16x64xbf16, #tpu.memory_space<vmem>>, vector<16x64xbf16>
    %5 = vector.extract_strided_slice %2 {offsets = [0, 64], sizes = [64, 64], strides = [1, 1]} : vector<64x128xbf16> to vector<64x64xbf16>
    %cst = arith.constant dense<0.000000e+00> : vector<16x64xf32>
    %6 = tpu.matmul %4, %5, %cst {dimension_numbers = #tpu.dot_dimension_numbers<[1], [0], [0], [1], [0, 0, 1, 1], [], []>} : vector<16x64xbf16>, vector<64x64xbf16>, vector<16x64xf32> -> vector<16x64xf32>
    %7 = vector.extract_strided_slice %3 {offsets = [0, 64], sizes = [1, 64], strides = [1, 1]} : vector<1x128xf32> to vector<1x64xf32>
    %8 = vector.broadcast %7 : vector<1x64xf32> to vector<16x64xf32>
    %9 = arith.addf %6, %8 : vector<16x64xf32>
    %10 = vector.extract_strided_slice %9 {offsets = [0, 0], sizes = [16, 32], strides = [1, 1]} : vector<16x64xf32> to vector<16x32xf32>
    %11 = vector.extract_strided_slice %9 {offsets = [0, 32], sizes = [16, 32], strides = [1, 1]} : vector<16x64xf32> to vector<16x32xf32>
    %12 = arith.truncf %11 : vector<16x32xf32> to vector<16x32xbf16>
    %13 = arith.index_cast %1 : i32 to index
    %c0_5 = arith.constant 0 : index
    %14 = vector.load %arg1[%13, %c0_5] : memref<16x64xbf16, #tpu.memory_space<vmem>>, vector<8x64xbf16>
    %15 = vector.extract_strided_slice %2 {offsets = [0, 0], sizes = [64, 64], strides = [1, 1]} : vector<64x128xbf16> to vector<64x64xbf16>
    %cst_6 = arith.constant dense<0.000000e+00> : vector<8x64xf32>
    %16 = tpu.matmul %14, %15, %cst_6 {dimension_numbers = #tpu.dot_dimension_numbers<[1], [0], [0], [1], [0, 0, 1, 1], [], []>} : vector<8x64xbf16>, vector<64x64xbf16>, vector<8x64xf32> -> vector<8x64xf32>
    %17 = vector.extract_strided_slice %3 {offsets = [0, 0], sizes = [1, 64], strides = [1, 1]} : vector<1x128xf32> to vector<1x64xf32>
    %18 = vector.broadcast %17 : vector<1x64xf32> to vector<8x64xf32>
    %19 = arith.addf %16, %18 : vector<8x64xf32>
    %20 = arith.index_cast %1 : i32 to index
    %c0_7 = arith.constant 0 : index
    %21 = vector.load %arg5[%20, %c0_7] : memref<16x64xf32, #tpu.memory_space<vmem>>, vector<8x64xf32>
    %22 = arith.index_cast %1 : i32 to index
    %c0_8 = arith.constant 0 : index
    %23 = vector.load %arg6[%22, %c0_8] : memref<16x64xf32, #tpu.memory_space<vmem>>, vector<8x64xf32>
    %c0_9 = arith.constant 0 : index
    %c0_10 = arith.constant 0 : index
    %24 = vector.load %arg4[%c0_9, %c0_10] : memref<64x64xbf16, #tpu.memory_space<vmem>>, vector<64x64xbf16>
    %25 = arith.truncf %19 : vector<8x64xf32> to vector<8x64xbf16>
    %cst_11 = arith.constant dense<0.000000e+00> : vector<8x64xf32>
    %26 = tpu.matmul %25, %24, %cst_11 {dimension_numbers = #tpu.dot_dimension_numbers<[1], [0], [0], [1], [0, 0, 1, 1], [], []>} : vector<8x64xbf16>, vector<64x64xbf16>, vector<8x64xf32> -> vector<8x64xf32>
    %27 = arith.mulf %19, %21 : vector<8x64xf32>
    %28 = arith.mulf %26, %23 : vector<8x64xf32>
    %29 = arith.addf %27, %28 : vector<8x64xf32>
    %cst_12 = arith.constant 2.500000e-01 : f32
    %30 = vector.broadcast %cst_12 : f32 to vector<8x64xf32>
    %31 = arith.mulf %29, %30 : vector<8x64xf32>
    %c0_13 = arith.constant 0 : index
    %c0_14 = arith.constant 0 : index
    %32 = vector.load %arg5[%c0_13, %c0_14] : memref<16x64xf32, #tpu.memory_space<vmem>>, vector<16x64xf32>
    %c0_15 = arith.constant 0 : index
    %c0_16 = arith.constant 0 : index
    %33 = vector.load %arg6[%c0_15, %c0_16] : memref<16x64xf32, #tpu.memory_space<vmem>>, vector<16x64xf32>
    %34 = arith.truncf %10 : vector<16x32xf32> to vector<16x32xbf16>
    %35 = vector.extract_strided_slice %24 {offsets = [0, 0], sizes = [32, 32], strides = [1, 1]} : vector<64x64xbf16> to vector<32x32xbf16>
    %cst_17 = arith.constant dense<0.000000e+00> : vector<16x32xf32>
    %36 = tpu.matmul %34, %35, %cst_17 {dimension_numbers = #tpu.dot_dimension_numbers<[1], [0], [0], [1], [0, 0, 1, 1], [], []>} : vector<16x32xbf16>, vector<32x32xbf16>, vector<16x32xf32> -> vector<16x32xf32>
    %37 = vector.extract_strided_slice %32 {offsets = [0, 0], sizes = [16, 32], strides = [1, 1]} : vector<16x64xf32> to vector<16x32xf32>
    %38 = arith.mulf %10, %37 : vector<16x32xf32>
    %39 = vector.extract_strided_slice %33 {offsets = [0, 0], sizes = [16, 32], strides = [1, 1]} : vector<16x64xf32> to vector<16x32xf32>
    %40 = arith.mulf %36, %39 : vector<16x32xf32>
    %41 = arith.addf %38, %40 : vector<16x32xf32>
    %42 = arith.truncf %41 : vector<16x32xf32> to vector<16x32xbf16>
    %43 = tpu.iota {dimensions = array<i32: 0>} : vector<16x16xi32>
    %44 = tpu.iota {dimensions = array<i32: 1>} : vector<16x16xi32>
    %c7_i32 = arith.constant 7 : i32
    %45 = vector.broadcast %c7_i32 : i32 to vector<16x16xi32>
    %46 = arith.andi %43, %45 : vector<16x16xi32>
    %47 = vector.broadcast %1 : i32 to vector<16x16xi32>
    %48 = arith.addi %46, %47 : vector<16x16xi32>
    %49 = arith.cmpi sle, %44, %48 : vector<16x16xi32>
    %50 = vector.extract_strided_slice %31 {offsets = [0, 0], sizes = [8, 16], strides = [1, 1]} : vector<8x64xf32> to vector<8x16xf32>
    %51 = vector.extract_strided_slice %31 {offsets = [0, 16], sizes = [8, 16], strides = [1, 1]} : vector<8x64xf32> to vector<8x16xf32>
    %52 = tpu.concatenate %50, %51 in 0 : vector<8x16xf32>, vector<8x16xf32> -> vector<16x16xf32>
    %53 = arith.truncf %52 : vector<16x16xf32> to vector<16x16xbf16>
    %54 = vector.extract_strided_slice %42 {offsets = [0, 0], sizes = [16, 16], strides = [1, 1]} : vector<16x32xbf16> to vector<16x16xbf16>
    %55 = vector.extract_strided_slice %12 {offsets = [0, 0], sizes = [16, 16], strides = [1, 1]} : vector<16x32xbf16> to vector<16x16xbf16>
    %cst_18 = arith.constant dense<0.000000e+00> : vector<16x16xf32>
    %56 = tpu.matmul %53, %54, %cst_18 {dimension_numbers = #tpu.dot_dimension_numbers<[1], [1], [0], [0], [0, 0, 1, 0], [], []>} : vector<16x16xbf16>, vector<16x16xbf16>, vector<16x16xf32> -> vector<16x16xf32>
    %cst_19 = arith.constant -1.000000e+30 : f32
    %57 = vector.broadcast %cst_19 : f32 to vector<16x16xf32>
    %58 = arith.select %49, %56, %57 : vector<16x16xi1>, vector<16x16xf32>
    %cst_20 = arith.constant dense<0xFF800000> : vector<16xf32>
    %59 = vector.multi_reduction <maximumf>, %58, %cst_20 [1] : vector<16x16xf32> to vector<16xf32>
    %60 = vector.shape_cast %59 : vector<16xf32> to vector<16x1xf32>
    %61 = vector.broadcast %60 : vector<16x1xf32> to vector<16x16xf32>
    %62 = arith.subf %58, %61 : vector<16x16xf32>
    %63 = math.exp %62 : vector<16x16xf32>
    %cst_21 = arith.constant dense<0.000000e+00> : vector<16xf32>
    %64 = vector.multi_reduction <add>, %63, %cst_21 [1] : vector<16x16xf32> to vector<16xf32>
    %65 = vector.shape_cast %64 : vector<16xf32> to vector<16x1xf32>
    %66 = arith.truncf %63 : vector<16x16xf32> to vector<16x16xbf16>
    %cst_22 = arith.constant dense<0.000000e+00> : vector<16x16xf32>
    %67 = tpu.matmul %66, %55, %cst_22 {dimension_numbers = #tpu.dot_dimension_numbers<[1], [0], [0], [1], [0, 0, 1, 1], [], []>} : vector<16x16xbf16>, vector<16x16xbf16>, vector<16x16xf32> -> vector<16x16xf32>
    %68 = tpu.reciprocal %65 {approx = true} : vector<16x1xf32> -> vector<16x1xf32>
    %69 = vector.broadcast %68 : vector<16x1xf32> to vector<16x16xf32>
    %70 = arith.mulf %67, %69 : vector<16x16xf32>
    %71 = vector.extract_strided_slice %70 {offsets = [0, 0], sizes = [8, 16], strides = [1, 1]} : vector<16x16xf32> to vector<8x16xf32>
    %c0_23 = arith.constant 0 : index
    %c0_24 = arith.constant 0 : index
    %72 = vector.load %arg9[%c0_23, %c0_24] : memref<8x64xf32, #tpu.memory_space<vmem>>, vector<8x16xf32>
    tpu.vector_store %arg9[%c0_23, %c0_24], %71 {strides = array<i32>} : memref<8x64xf32, #tpu.memory_space<vmem>>, vector<8x16xf32>,
    %73 = vector.extract_strided_slice %70 {offsets = [8, 0], sizes = [8, 16], strides = [1, 1]} : vector<16x16xf32> to vector<8x16xf32>
    %c0_25 = arith.constant 0 : index
    %c16 = arith.constant 16 : index
    %74 = vector.load %arg9[%c0_25, %c16] : memref<8x64xf32, #tpu.memory_space<vmem>>, vector<8x16xf32>
    tpu.vector_store %arg9[%c0_25, %c16], %73 {strides = array<i32>} : memref<8x64xf32, #tpu.memory_space<vmem>>, vector<8x16xf32>,
    %75 = vector.extract_strided_slice %31 {offsets = [0, 32], sizes = [8, 16], strides = [1, 1]} : vector<8x64xf32> to vector<8x16xf32>
    %76 = vector.extract_strided_slice %31 {offsets = [0, 48], sizes = [8, 16], strides = [1, 1]} : vector<8x64xf32> to vector<8x16xf32>
    %77 = tpu.concatenate %75, %76 in 0 : vector<8x16xf32>, vector<8x16xf32> -> vector<16x16xf32>
    %78 = arith.truncf %77 : vector<16x16xf32> to vector<16x16xbf16>
    %79 = vector.extract_strided_slice %42 {offsets = [0, 16], sizes = [16, 16], strides = [1, 1]} : vector<16x32xbf16> to vector<16x16xbf16>
    %80 = vector.extract_strided_slice %12 {offsets = [0, 16], sizes = [16, 16], strides = [1, 1]} : vector<16x32xbf16> to vector<16x16xbf16>
    %cst_26 = arith.constant dense<0.000000e+00> : vector<16x16xf32>
    %81 = tpu.matmul %78, %79, %cst_26 {dimension_numbers = #tpu.dot_dimension_numbers<[1], [1], [0], [0], [0, 0, 1, 0], [], []>} : vector<16x16xbf16>, vector<16x16xbf16>, vector<16x16xf32> -> vector<16x16xf32>
    %cst_27 = arith.constant -1.000000e+30 : f32
    %82 = vector.broadcast %cst_27 : f32 to vector<16x16xf32>
    %83 = arith.select %49, %81, %82 : vector<16x16xi1>, vector<16x16xf32>
    %cst_28 = arith.constant dense<0xFF800000> : vector<16xf32>
    %84 = vector.multi_reduction <maximumf>, %83, %cst_28 [1] : vector<16x16xf32> to vector<16xf32>
    %85 = vector.shape_cast %84 : vector<16xf32> to vector<16x1xf32>
    %86 = vector.broadcast %85 : vector<16x1xf32> to vector<16x16xf32>
    %87 = arith.subf %83, %86 : vector<16x16xf32>
    %88 = math.exp %87 : vector<16x16xf32>
    %cst_29 = arith.constant dense<0.000000e+00> : vector<16xf32>
    %89 = vector.multi_reduction <add>, %88, %cst_29 [1] : vector<16x16xf32> to vector<16xf32>
    %90 = vector.shape_cast %89 : vector<16xf32> to vector<16x1xf32>
    %91 = arith.truncf %88 : vector<16x16xf32> to vector<16x16xbf16>
    %cst_30 = arith.constant dense<0.000000e+00> : vector<16x16xf32>
    %92 = tpu.matmul %91, %80, %cst_30 {dimension_numbers = #tpu.dot_dimension_numbers<[1], [0], [0], [1], [0, 0, 1, 1], [], []>} : vector<16x16xbf16>, vector<16x16xbf16>, vector<16x16xf32> -> vector<16x16xf32>
    %93 = tpu.reciprocal %90 {approx = true} : vector<16x1xf32> -> vector<16x1xf32>
    %94 = vector.broadcast %93 : vector<16x1xf32> to vector<16x16xf32>
    %95 = arith.mulf %92, %94 : vector<16x16xf32>
    %96 = vector.extract_strided_slice %95 {offsets = [0, 0], sizes = [8, 16], strides = [1, 1]} : vector<16x16xf32> to vector<8x16xf32>
    %c0_31 = arith.constant 0 : index
    %c32 = arith.constant 32 : index
    %97 = vector.load %arg9[%c0_31, %c32] : memref<8x64xf32, #tpu.memory_space<vmem>>, vector<8x16xf32>
    tpu.vector_store %arg9[%c0_31, %c32], %96 {strides = array<i32>} : memref<8x64xf32, #tpu.memory_space<vmem>>, vector<8x16xf32>,
    %98 = vector.extract_strided_slice %95 {offsets = [8, 0], sizes = [8, 16], strides = [1, 1]} : vector<16x16xf32> to vector<8x16xf32>
    %c0_32 = arith.constant 0 : index
    %c48 = arith.constant 48 : index
    %99 = vector.load %arg9[%c0_32, %c48] : memref<8x64xf32, #tpu.memory_space<vmem>>, vector<8x16xf32>
    tpu.vector_store %arg9[%c0_32, %c48], %98 {strides = array<i32>} : memref<8x64xf32, #tpu.memory_space<vmem>>, vector<8x16xf32>,
    %c0_33 = arith.constant 0 : index
    %c0_34 = arith.constant 0 : index
    %100 = vector.load %arg9[%c0_33, %c0_34] : memref<8x64xf32, #tpu.memory_space<vmem>>, vector<8x64xf32>
    %101 = arith.truncf %100 : vector<8x64xf32> to vector<8x64xbf16>
    %c0_35 = arith.constant 0 : index
    %c0_36 = arith.constant 0 : index
    %102 = vector.load %arg7[%c0_35, %c0_36] : memref<64x64xbf16, #tpu.memory_space<vmem>>, vector<64x64xbf16>
    %cst_37 = arith.constant dense<0.000000e+00> : vector<8x64xf32>
    %103 = tpu.matmul %101, %102, %cst_37 {dimension_numbers = #tpu.dot_dimension_numbers<[1], [0], [0], [1], [0, 0, 1, 1], [], []>} : vector<8x64xbf16>, vector<64x64xbf16>, vector<8x64xf32> -> vector<8x64xf32>
    %c0_38 = arith.constant 0 : index
    %c0_39 = arith.constant 0 : index
    %104 = vector.load %arg8[%c0_38, %c0_39] : memref<8x64xf32, #tpu.memory_space<vmem>>, vector<8x64xf32>
    tpu.vector_store %arg8[%c0_38, %c0_39], %103 {strides = array<i32>} : memref<8x64xf32, #tpu.memory_space<vmem>>, vector<8x64xf32>,
    return
  }
  func.func @transform_0(%arg0: i32) -> (i32, i32) {
    %c0_i32 = arith.constant 0 : i32
    %c0_i32_0 = arith.constant 0 : i32
    %c0_i32_1 = arith.constant 0 : i32
    return %c0_i32, %c0_i32_0 : i32, i32
  }
  func.func @transform_1(%arg0: i32) -> (i32, i32) {
    %c0_i32 = arith.constant 0 : i32
    %c0_i32_0 = arith.constant 0 : i32
    %c0_i32_1 = arith.constant 0 : i32
    return %c0_i32, %c0_i32_0 : i32, i32
  }
  func.func @transform_2(%arg0: i32) -> (i32, i32) {
    %c0_i32 = arith.constant 0 : i32
    %c0_i32_0 = arith.constant 0 : i32
    %c0_i32_1 = arith.constant 0 : i32
    return %c0_i32, %c0_i32_0 : i32, i32
  }
  func.func @transform_3(%arg0: i32) -> (i32, i32) {
    %c0_i32 = arith.constant 0 : i32
    %c0_i32_0 = arith.constant 0 : i32
    %c0_i32_1 = arith.constant 0 : i32
    return %c0_i32, %c0_i32_0 : i32, i32
  }
  func.func @transform_4(%arg0: i32) -> (i32, i32) {
    %c0_i32 = arith.constant 0 : i32
    %c0_i32_0 = arith.constant 0 : i32
    %c0_i32_1 = arith.constant 0 : i32
    return %c0_i32, %c0_i32_0 : i32, i32
  }
  func.func @transform_5(%arg0: i32) -> (i32, i32) {
    %c0_i32 = arith.constant 0 : i32
    %c0_i32_0 = arith.constant 0 : i32
    %c0_i32_1 = arith.constant 0 : i32
    return %c0_i32, %c0_i32_0 : i32, i32
  }
  func.func @transform_6(%arg0: i32) -> (i32, i32) {
    %c0_i32 = arith.constant 0 : i32
    %c0_i32_0 = arith.constant 0 : i32
    %c0_i32_1 = arith.constant 0 : i32
    return %c0_i32, %c0_i32_0 : i32, i32
  }
  func.func @transform_7(%arg0: i32) -> (i32, i32) {
    %c0_i32 = arith.constant 0 : i32
    %c0_i32_0 = arith.constant 0 : i32
    return %arg0, %c0_i32 : i32, i32
  }
}

</mosaic_0001>

<llo_original>
// kernel: glm_attention.1
$region0: #{glm_attention.1}
  #allocation0 [shape = 'u32[]', space=smem, size = 0x4, offset = 0x4, fixed_abs, tag = 'smem constant byte address 0x4 - core index']
  #allocation1 [shape = 'u32[144,128]{1,0:T(1,128)}', space=vmem, size = 0x12000, scoped, tag = 'internal scratch']
  #allocation2 [shape = 'f32[8,64]{1,0:T(8,128)}', space=vmem, size = 0x1000, scoped, tag = 'scratch operand']
  %s0 = inlined_call_operand.vmem [shape: bf16[16,64], index: 0, kind: input, shape index: {}]
  %s1 = inlined_call_operand.vmem [shape: bf16[64,128], index: 1, kind: input, shape index: {}]
  %s2 = inlined_call_operand.vmem [shape: f32[1,128], index: 2, kind: input, shape index: {}]
  %s3 = inlined_call_operand.vmem [shape: bf16[64,64], index: 3, kind: input, shape index: {}]
  %s4 = inlined_call_operand.vmem [shape: f32[16,64], index: 4, kind: input, shape index: {}]
  %s5 = inlined_call_operand.vmem [shape: f32[16,64], index: 5, kind: input, shape index: {}]
  %s6 = inlined_call_operand.vmem [shape: bf16[64,64], index: 6, kind: input, shape index: {}]
  %s7 = inlined_call_operand.hbm [shape: f32[16,64], index: 7, kind: output, shape index: {}]
  %s8 = sld [smem:[#allocation0]]
  $region61: #{glm_attention.1} parent=0
    _
  %s10 = ssub.s32 1, %s8
  %s11 = scalar_select 0, %s10, %s8
  $region1: #{glm_attention.1} parent=0
    #allocation3 [shape = 'u8[8192]{0}', space=vmem, size = 0x2000, scoped, tag = 'output window, operand 0']
    #allocation4 [shape = 's32[2]{0}', space=sflag, size = 0x8, scoped, tag = 'scoped memory for glm_attention.1']
    %12 = vsyncpa [#allocation4], 0
    %s13 = scalar_lea.sflag [#allocation4], 1
    %14 = vsyncpa %s13, 0
    loop: start=0, step=1, limit=4
    $region2: #{glm_attention.1} parent=1 // loop_pre_header
      _
    $region3: #{glm_attention.1} parent=1 // loop_header
      %s16 = sphi 0, %s20
      %p17 = scmp.ge.s32.totalorder %s16, 4
      %s24 = sphi 0, %s24
      %s26 = sphi 0, %s24
      %s27 = sphi 0, %s26
      %s41 = sphi 0, %s27
      %s45 = sphi 0, %s45
      %s47 = sphi 0, %s45
      %s48 = sphi 0, %s47
      %s62 = sphi 0, %s48
      %s66 = sphi 0, %s66
      %s68 = sphi 0, %s66
      %s69 = sphi 0, %s68
      %s83 = sphi 0, %s69
      %s87 = sphi 0, %s87
      %s89 = sphi 0, %s87
      %s90 = sphi 0, %s89
      %s104 = sphi 0, %s90
      %s108 = sphi 0, %s108
      %s110 = sphi 0, %s108
      %s111 = sphi 0, %s110
      %s125 = sphi 0, %s111
      %s129 = sphi 0, %s129
      %s131 = sphi 0, %s129
      %s132 = sphi 0, %s131
      %s146 = sphi 0, %s132
      %s150 = sphi 0, %s150
      %s152 = sphi 0, %s150
      %s153 = sphi 0, %s152
      %s167 = sphi 0, %s153
      %s173 = sphi 0, %s175
      %s176 = sphi 0, %s173
      %s177 = sphi 0, %s176
      %s193 = sphi 0, %s177
    $region4: #{glm_attention.1} parent=1 // loop_header_branch
      %19 = sbr.rel (%p17) target = $region8
    $region5: #{glm_attention.1} parent=1 // loop_body
      %s21 = ssub.s32 %s16, 1
      %s22 = ssub.s32 %s16, 2
      %s23 = sadd.s32 %s16, 1
      %s25 = sadd.s32 %s24, 1
      %p28 = scmp.eq.s32.totalorder %s16, 1
      %p29 = scmp.ne.s32.totalorder %s24, %s26
      %p30 = scmp.eq.s32.totalorder %s16, 0
      %p31 = por %p29, %p30
      %p32 = scmp.ne.s32.totalorder %s24, %s26
      %p33 = scmp.eq.s32.totalorder %s21, 1
      %p34 = por %p32, %p33
      %p35 = scmp.ne.s32.totalorder %s26, %s27
      %p36 = scmp.eq.s32.totalorder %s21, 0
      %p37 = por %p35, %p36
      %p38 = scmp.ne.s32.totalorder %s26, %s27
      %p39 = scmp.eq.s32.totalorder %s22, 1
      %p40 = por %p38, %p39
      %p42 = scmp.ne.s32.totalorder %s27, %s41
      %p43 = scmp.eq.s32.totalorder %s22, 0
      %p44 = por %p42, %p43
      %s46 = sadd.s32 %s45, 1
      %p49 = scmp.eq.s32.totalorder %s16, 1
      %p50 = scmp.ne.s32.totalorder %s45, %s47
      %p51 = scmp.eq.s32.totalorder %s16, 0
      %p52 = por %p50, %p51
      %p53 = scmp.ne.s32.totalorder %s45, %s47
      %p54 = scmp.eq.s32.totalorder %s21, 1
      %p55 = por %p53, %p54
      %p56 = scmp.ne.s32.totalorder %s47, %s48
      %p57 = scmp.eq.s32.totalorder %s21, 0
      %p58 = por %p56, %p57
      %p59 = scmp.ne.s32.totalorder %s47, %s48
      %p60 = scmp.eq.s32.totalorder %s22, 1
      %p61 = por %p59, %p60
      %p63 = scmp.ne.s32.totalorder %s48, %s62
      %p64 = scmp.eq.s32.totalorder %s22, 0
      %p65 = por %p63, %p64
      %s67 = sadd.s32 %s66, 1
      %p70 = scmp.eq.s32.totalorder %s16, 1
      %p71 = scmp.ne.s32.totalorder %s66, %s68
      %p72 = scmp.eq.s32.totalorder %s16, 0
      %p73 = por %p71, %p72
      %p74 = scmp.ne.s32.totalorder %s66, %s68
      %p75 = scmp.eq.s32.totalorder %s21, 1
      %p76 = por %p74, %p75
      %p77 = scmp.ne.s32.totalorder %s68, %s69
      %p78 = scmp.eq.s32.totalorder %s21, 0
      %p79 = por %p77, %p78
      %p80 = scmp.ne.s32.totalorder %s68, %s69
      %p81 = scmp.eq.s32.totalorder %s22, 1
      %p82 = por %p80, %p81
      %p84 = scmp.ne.s32.totalorder %s69, %s83
      %p85 = scmp.eq.s32.totalorder %s22, 0
      %p86 = por %p84, %p85
      %s88 = sadd.s32 %s87, 1
      %p91 = scmp.eq.s32.totalorder %s16, 1
      %p92 = scmp.ne.s32.totalorder %s87, %s89
      %p93 = scmp.eq.s32.totalorder %s16, 0
      %p94 = por %p92, %p93
      %p95 = scmp.ne.s32.totalorder %s87, %s89
      %p96 = scmp.eq.s32.totalorder %s21, 1
      %p97 = por %p95, %p96
      %p98 = scmp.ne.s32.totalorder %s89, %s90
      %p99 = scmp.eq.s32.totalorder %s21, 0
      %p100 = por %p98, %p99
      %p101 = scmp.ne.s32.totalorder %s89, %s90
      %p102 = scmp.eq.s32.totalorder %s22, 1
      %p103 = por %p101, %p102
      %p105 = scmp.ne.s32.totalorder %s90, %s104
      %p106 = scmp.eq.s32.totalorder %s22, 0
      %p107 = por %p105, %p106
      %s109 = sadd.s32 %s108, 1
      %p112 = scmp.eq.s32.totalorder %s16, 1
      %p113 = scmp.ne.s32.totalorder %s108, %s110
      %p114 = scmp.eq.s32.totalorder %s16, 0
      %p115 = por %p113, %p114
      %p116 = scmp.ne.s32.totalorder %s108, %s110
      %p117 = scmp.eq.s32.totalorder %s21, 1
      %p118 = por %p116, %p117
      %p119 = scmp.ne.s32.totalorder %s110, %s111
      %p120 = scmp.eq.s32.totalorder %s21, 0
      %p121 = por %p119, %p120
      %p122 = scmp.ne.s32.totalorder %s110, %s111
      %p123 = scmp.eq.s32.totalorder %s22, 1
      %p124 = por %p122, %p123
      %p126 = scmp.ne.s32.totalorder %s111, %s125
      %p127 = scmp.eq.s32.totalorder %s22, 0
      %p128 = por %p126, %p127
      %s130 = sadd.s32 %s129, 1
      %p133 = scmp.eq.s32.totalorder %s16, 1
      %p134 = scmp.ne.s32.totalorder %s129, %s131
      %p135 = scmp.eq.s32.totalorder %s16, 0
      %p136 = por %p134, %p135
      %p137 = scmp.ne.s32.totalorder %s129, %s131
      %p138 = scmp.eq.s32.totalorder %s21, 1
      %p139 = por %p137, %p138
      %p140 = scmp.ne.s32.totalorder %s131, %s132
      %p141 = scmp.eq.s32.totalorder %s21, 0
      %p142 = por %p140, %p141
      %p143 = scmp.ne.s32.totalorder %s131, %s132
      %p144 = scmp.eq.s32.totalorder %s22, 1
      %p145 = por %p143, %p144
      %p147 = scmp.ne.s32.totalorder %s132, %s146
      %p148 = scmp.eq.s32.totalorder %s22, 0
      %p149 = por %p147, %p148
      %s151 = sadd.s32 %s150, 1
      %p154 = scmp.eq.s32.totalorder %s16, 1
      %p155 = scmp.ne.s32.totalorder %s150, %s152
      %p156 = scmp.eq.s32.totalorder %s16, 0
      %p157 = por %p155, %p156
      %p158 = scmp.ne.s32.totalorder %s150, %s152
      %p159 = scmp.eq.s32.totalorder %s21, 1
      %p160 = por %p158, %p159
      %p161 = scmp.ne.s32.totalorder %s152, %s153
      %p162 = scmp.eq.s32.totalorder %s21, 0
      %p163 = por %p161, %p162
      %p164 = scmp.ne.s32.totalorder %s152, %s153
      %p165 = scmp.eq.s32.totalorder %s22, 1
      %p166 = por %p164, %p165
      %p168 = scmp.ne.s32.totalorder %s153, %s167
      %p169 = scmp.eq.s32.totalorder %s22, 0
      %p170 = por %p168, %p169
      %s171 = ssub.s32 %s16, %s23
      %p172 = scmp.eq.s32.totalorder %s171, 0
      %s174 = sadd.s32 %s173, 1
      %s175 = scalar_select %p172, %s173, %s174
      %p178 = pneg %p172
      %p179 = scmp.eq.s32.totalorder %s16, 1
      %p180 = por %p178, %p179
      %p181 = scmp.ne.s32.totalorder %s173, %s176
      %p182 = scmp.eq.s32.totalorder %s16, 0
      %p183 = por %p181, %p182
      %p184 = scmp.ne.s32.totalorder %s173, %s176
      %p185 = scmp.eq.s32.totalorder %s21, 1
      %p186 = por %p184, %p185
      %p187 = scmp.ne.s32.totalorder %s176, %s177
      %p188 = scmp.eq.s32.totalorder %s21, 0
      %p189 = por %p187, %p188
      %p190 = scmp.ne.s32.totalorder %s176, %s177
      %p191 = scmp.eq.s32.totalorder %s22, 1
      %p192 = por %p190, %p191
      %p194 = scmp.ne.s32.totalorder %s177, %s193
      %p195 = scmp.eq.s32.totalorder %s22, 0
      %p196 = por %p194, %p195
      %p197 = scmp.le.s32.totalorder 1, %s16
      %p198 = scmp.lt.s32.totalorder %s16, 3
      %p199 = pnand %p197, %p198
      %p200 = pneg %p199
      // Predicated region
      $region9: #{glm_attention.1} parent=5 // pred_check
        _
      $region10: #{glm_attention.1} parent=5 // pred_check_branch
        %202 = sbr.rel (%p199) target = $region12
      $region11: #{glm_attention.1} parent=5 // pred_region
        %s203 = ssub.s32 %s16, 1
        // Predicated region
        $region13: #{glm_attention.1} parent=11 // pred_check
          %p204 = pneg %p37
        $region14: #{glm_attention.1} parent=11 // pred_check_branch
          %206 = sbr.rel (%p204) target = $region16
        $region15: #{glm_attention.1} parent=11 // pred_region
          _
        $region16: #{glm_attention.1} parent=11 // pred_fallthru
          _
        // Predicated region
        $region17: #{glm_attention.1} parent=11 // pred_check
          %p207 = pneg %p58
        $region18: #{glm_attention.1} parent=11 // pred_check_branch
          %209 = sbr.rel (%p207) target = $region20
        $region19: #{glm_attention.1} parent=11 // pred_region
          _
        $region20: #{glm_attention.1} parent=11 // pred_fallthru
          _
        // Predicated region
        $region21: #{glm_attention.1} parent=11 // pred_check
          %p210 = pneg %p79
        $region22: #{glm_attention.1} parent=11 // pred_check_branch
          %212 = sbr.rel (%p210) target = $region24
        $region23: #{glm_attention.1} parent=11 // pred_region
          _
        $region24: #{glm_attention.1} parent=11 // pred_fallthru
          _
        // Predicated region
        $region25: #{glm_attention.1} parent=11 // pred_check
          %p213 = pneg %p100
        $region26: #{glm_attention.1} parent=11 // pred_check_branch
          %215 = sbr.rel (%p213) target = $region28
        $region27: #{glm_attention.1} parent=11 // pred_region
          _
        $region28: #{glm_attention.1} parent=11 // pred_fallthru
          _
        // Predicated region
        $region29: #{glm_attention.1} parent=11 // pred_check
          %p216 = pneg %p121
        $region30: #{glm_attention.1} parent=11 // pred_check_branch
          %218 = sbr.rel (%p216) target = $region32
        $region31: #{glm_attention.1} parent=11 // pred_region
          _
        $region32: #{glm_attention.1} parent=11 // pred_fallthru
          _
        // Predicated region
        $region33: #{glm_attention.1} parent=11 // pred_check
          %p219 = pneg %p142
        $region34: #{glm_attention.1} parent=11 // pred_check_branch
          %221 = sbr.rel (%p219) target = $region36
        $region35: #{glm_attention.1} parent=11 // pred_region
          _
        $region36: #{glm_attention.1} parent=11 // pred_fallthru
          _
        // Predicated region
        $region37: #{glm_attention.1} parent=11 // pred_check
          %p222 = pneg %p163
        $region38: #{glm_attention.1} parent=11 // pred_check_branch
          %224 = sbr.rel (%p222) target = $region40
        $region39: #{glm_attention.1} parent=11 // pred_region
          _
        $region40: #{glm_attention.1} parent=11 // pred_fallthru
          _
      $region12: #{glm_attention.1} parent=5 // pred_fallthru
        _
      %p225 = scmp.lt.s32.totalorder %s16, 2
      // Predicated region
      $region41: #{glm_attention.1} parent=5 // pred_check
        %p226 = pneg %p225
      $region42: #{glm_attention.1} parent=5 // pred_check_branch
        %228 = sbr.rel (%p226) target = $region44
      $region43: #{glm_attention.1} parent=5 // pred_region
        _
      $region44: #{glm_attention.1} parent=5 // pred_fallthru
        _
      %p229 = scmp.le.s32.totalorder 1, %s16
      %p230 = scmp.lt.s32.totalorder %s16, 3
      %p231 = pnand %p229, %p230
      %p232 = pneg %p231
      // Predicated region
      $region45: #{glm_attention.1} parent=5 // pred_check
        _
      $region46: #{glm_attention.1} parent=5 // pred_check_branch
        %234 = sbr.rel (%p231) target = $region48
      $region47: #{glm_attention.1} parent=5 // pred_region
        %s235 = ssub.s32 %s16, 1
        %p236 = pneg %p37
        %p237 = pneg %p34
        %p238 = pneg %p58
        %p239 = pneg %p55
        %p240 = pneg %p79
        %p241 = pneg %p76
        %p242 = pneg %p100
        %p243 = pneg %p97
        %p244 = pneg %p121
        %p245 = pneg %p118
        %p246 = pneg %p142
        %p247 = pneg %p139
        %p248 = pneg %p163
        %p249 = pneg %p160
        %p250 = pneg %p189
        %p251 = pneg %p186
        %s252 = sand.u32 %s176, 1
        %s253 = scalar_lea.sflag [#allocation4], %s252
        %s254 = sand.u32 %s176, 1
        %s255 = smul.addr %s254, 8
        %s256 = scalar_lea.vmem [#allocation3], %s255
        %s258 = smul.u32 %s21, 8
        %v259 = vld [vmem:[%s1] sm:$0xf]
        %v260 = vld [vmem:[%s1 + $0x4] sm:$0xf]
        %v261 = vld [vmem:[%s1 + $0x8] sm:$0xf]
        %v262 = vld [vmem:[%s1 + $0xc] sm:$0xf]
        %v263 = vld [vmem:[%s1 + $0x10] sm:$0xf]
        %v264 = vld [vmem:[%s1 + $0x14] sm:$0xf]
        %v265 = vld [vmem:[%s1 + $0x18] sm:$0xf]
        %v266 = vld [vmem:[%s1 + $0x1c] sm:$0xf]
        %v267 = vld [vmem:[%s2] sm:$0x1]
        %v268 = vld [vmem:[%s0] sm:$0xf]
        %v269 = vld [vmem:[%s0 + $0x4] sm:$0xf]
        %v271 = vlaneseq
        %v272 = vshrl.u32 %v271, 7
        %v273 = vsub.s32 0, %v272
        %v274 = vrot.slane %v267, %v273
        %v277 = vunpack.c.l.b16 %v268
        %v278 = vunpack.c.l.b16 %v269
        %v279 = vpack.c.b16 %v278, %v277
        %v288 = vunpack.c.l.b16 %v259
        %v289 = vunpack.c.l.b16 %v260
        %v290 = vunpack.c.l.b16 %v261
        %v291 = vunpack.c.l.b16 %v262
        %v292 = vunpack.c.l.b16 %v263
        %v293 = vunpack.c.l.b16 %v264
        %v294 = vunpack.c.l.b16 %v265
        %v295 = vunpack.c.l.b16 %v266
        %v296 = vpack.c.b16 %v289, %v288
        %v297 = vpack.c.b16 %v291, %v290
        %v298 = vpack.c.b16 %v293, %v292
        %v299 = vpack.c.b16 %v295, %v294
        %300 = vrot.lane.b32.xlu0 %v296, 64
        %v301 = vpop.permute.xlu0 %300
        %302 = vrot.lane.b32.xlu0 %v297, 64
        %v303 = vpop.permute.xlu0 %302
        %304 = vrot.lane.b32.xlu0 %v298, 64
        %v305 = vpop.permute.xlu0 %304
        %306 = vrot.lane.b32.xlu0 %v299, 64
        %v307 = vpop.permute.xlu0 %306
        %312 = vrot.lane.b32.xlu0 %v274, 64
        %v313 = vpop.permute.xlu0 %312
        %vm315 = vcmask 523264
        %v317 = vsel %vm315, %v279, 0
        %319 = vmatprep.subr.bf16.mxu0 0
        %320 = vmatpush1.bf16.msra.mxu0 0
        %321 = vmatprep.subr.bf16.mxu0 0
        %322 = vmatpush1.bf16.msra.mxu0 0
        %323 = vmatprep.subr.bf16.mxu0 0
        %324 = vmatpush1.bf16.msra.mxu0 0
        %325 = vmatprep.subr.bf16.mxu0 0
        %326 = vmatpush1.bf16.msra.mxu0 0
        %327 = vmatprep.subr.bf16.mxu0 0
        %328 = vmatpush1.bf16.msra.mxu0 %v307
        %329 = vmatprep.subr.bf16.mxu0 0
        %330 = vmatpush1.bf16.msra.mxu0 %v305
        %331 = vmatprep.subr.bf16.mxu0 0
        %332 = vmatpush1.bf16.msra.mxu0 %v303
        %333 = vmatprep.subr.bf16.mxu0 0
        %334 = vmatpush1.bf16.msra.mxu0 %v301
        %335 = vmatprep.subr.bf16.mxu0 0
        %336 = vmatpush2.bf16.msra.mxu0 0
        %337 = vmatprep.subr.bf16.mxu0 0
        %338 = vmatpush2.bf16.msra.mxu0 0
        %339 = vmatprep.subr.bf16.mxu0 0
        %340 = vmatpush2.bf16.msra.mxu0 0
        %341 = vmatprep.subr.bf16.mxu0 0
        %342 = vmatpush2.bf16.msra.mxu0 0
        %343 = vmatprep.subr.bf16.mxu0 0
        %344 = vmatpush2.bf16.msra.mxu0 0
        %345 = vmatprep.subr.bf16.mxu0 0
        %346 = vmatpush2.bf16.msra.mxu0 0
        %347 = vmatprep.subr.bf16.mxu0 0
        %348 = vmatpush2.bf16.msra.mxu0 0
        %349 = vmatprep.subr.bf16.mxu0 0
        %350 = vmatpush2.bf16.msra.mxu0 0
        %351 = vmatprep.mubr.bf16.mxu0 0
        %352 = vmatmul.mubr.bf16.gmra.mxu0 %v317
        %v353 = vpop.f32.mrf.mxu0
        %v354 = vadd.f32 %v313, %v353
        %v355 = vpop.f32.mrf.mxu0
        %v356 = vpop.f32.mrf.mxu0
        %v357 = vadd.f32 %v313, %v356
        %v358 = vpop.f32.mrf.mxu0
        %359 = vdwg.mxu0
        %v360 = vpack.c.bf16 %v357, %v354
        %s361 = sshra.s32 %s258, 3
        %s362 = sand.u32 %s258, 7
        %s363 = smul.addr %s361, 4
        %s364 = scalar_lea.vmem %s0, %s363
        %v365 = vld [vmem:[%s364] sm:$0xf]
        %v372 = vsel %vm315, %v365, 0
        %374 = vmatprep.subr.bf16.mxu0 0
        %375 = vmatpush1.bf16.msra.mxu0 0
        %376 = vmatprep.subr.bf16.mxu0 0
        %377 = vmatpush1.bf16.msra.mxu0 0
        %378 = vmatprep.subr.bf16.mxu0 0
        %379 = vmatpush1.bf16.msra.mxu0 0
        %380 = vmatprep.subr.bf16.mxu0 0
        %381 = vmatpush1.bf16.msra.mxu0 0
        %382 = vmatprep.subr.bf16.mxu0 0
        %383 = vmatpush1.bf16.msra.mxu0 %v299
        %384 = vmatprep.subr.bf16.mxu0 0
        %385 = vmatpush1.bf16.msra.mxu0 %v298
        %386 = vmatprep.subr.bf16.mxu0 0
        %387 = vmatpush1.bf16.msra.mxu0 %v297
        %388 = vmatprep.subr.bf16.mxu0 0
        %389 = vmatpush1.bf16.msra.mxu0 %v296
        %390 = vmatprep.subr.bf16.mxu0 0
        %391 = vmatpush2.bf16.msra.mxu0 0
        %392 = vmatprep.subr.bf16.mxu0 0
        %393 = vmatpush2.bf16.msra.mxu0 0
        %394 = vmatprep.subr.bf16.mxu0 0
        %395 = vmatpush2.bf16.msra.mxu0 0
        %396 = vmatprep.subr.bf16.mxu0 0
        %397 = vmatpush2.bf16.msra.mxu0 0
        %398 = vmatprep.subr.bf16.mxu0 0
        %399 = vmatpush2.bf16.msra.mxu0 0
        %400 = vmatprep.subr.bf16.mxu0 0
        %401 = vmatpush2.bf16.msra.mxu0 0
        %402 = vmatprep.subr.bf16.mxu0 0
        %403 = vmatpush2.bf16.msra.mxu0 0
        %404 = vmatprep.subr.bf16.mxu0 0
        %405 = vmatpush2.bf16.msra.mxu0 0
        %406 = vmatprep.mubr.bf16.mxu0 0
        %407 = vmatmul.mubr.bf16.gmra.mxu0 %v372
        %v408 = vpop.f32.mrf.mxu0
        %v409 = vadd.f32 %v274, %v408
        %v410 = vpop.f32.mrf.mxu0
        %v411 = vpop.f32.mrf.mxu0
        %v412 = vpop.f32.mrf.mxu0
        %413 = vdwg.mxu0
        %s414 = scalar_lea.vmem %s4, %s258
        %v415 = vld [vmem:[%s414] sm:$0xff]
        %s416 = scalar_lea.vmem %s5, %s258
        %v417 = vld [vmem:[%s416] sm:$0xff]
        %v418 = vld [vmem:[%s3] sm:$0xf]
        %v419 = vld [vmem:[%s3 + $0x4] sm:$0xf]
        %v420 = vld [vmem:[%s3 + $0x8] sm:$0xf]
        %v421 = vld [vmem:[%s3 + $0xc] sm:$0xf]
        %v422 = vld [vmem:[%s3 + $0x10] sm:$0xf]
        %v423 = vld [vmem:[%s3 + $0x14] sm:$0xf]
        %v424 = vld [vmem:[%s3 + $0x18] sm:$0xf]
        %v425 = vld [vmem:[%s3 + $0x1c] sm:$0xf]
        %v426 = vpack.c.bf16 %v409, %v409
        %v435 = vunpack.c.l.b16 %v418
        %v436 = vunpack.c.l.b16 %v419
        %v437 = vunpack.c.l.b16 %v420
        %v438 = vunpack.c.l.b16 %v421
        %v439 = vunpack.c.l.b16 %v422
        %v440 = vunpack.c.l.b16 %v423
        %v441 = vunpack.c.l.b16 %v424
        %v442 = vunpack.c.l.b16 %v425
        %v443 = vpack.c.b16 %v436, %v435
        %v444 = vpack.c.b16 %v438, %v437
        %v445 = vpack.c.b16 %v440, %v439
        %v446 = vpack.c.b16 %v442, %v441
        %v452 = vsel %vm315, %v426, 0
        %454 = vmatprep.subr.bf16.mxu0 0
        %455 = vmatpush1.bf16.msra.mxu0 0
        %456 = vmatprep.subr.bf16.mxu0 0
        %457 = vmatpush1.bf16.msra.mxu0 0
        %458 = vmatprep.subr.bf16.mxu0 0
        %459 = vmatpush1.bf16.msra.mxu0 0
        %460 = vmatprep.subr.bf16.mxu0 0
        %461 = vmatpush1.bf16.msra.mxu0 0
        %462 = vmatprep.subr.bf16.mxu0 0
        %463 = vmatpush1.bf16.msra.mxu0 %v446
        %464 = vmatprep.subr.bf16.mxu0 0
        %465 = vmatpush1.bf16.msra.mxu0 %v445
        %466 = vmatprep.subr.bf16.mxu0 0
        %467 = vmatpush1.bf16.msra.mxu0 %v444
        %468 = vmatprep.subr.bf16.mxu0 0
        %469 = vmatpush1.bf16.msra.mxu0 %v443
        %470 = vmatprep.subr.bf16.mxu0 0
        %471 = vmatpush2.bf16.msra.mxu0 0
        %472 = vmatprep.subr.bf16.mxu0 0
        %473 = vmatpush2.bf16.msra.mxu0 0
        %474 = vmatprep.subr.bf16.mxu0 0
        %475 = vmatpush2.bf16.msra.mxu0 0
        %476 = vmatprep.subr.bf16.mxu0 0
        %477 = vmatpush2.bf16.msra.mxu0 0
        %478 = vmatprep.subr.bf16.mxu0 0
        %479 = vmatpush2.bf16.msra.mxu0 0
        %480 = vmatprep.subr.bf16.mxu0 0
        %481 = vmatpush2.bf16.msra.mxu0 0
        %482 = vmatprep.subr.bf16.mxu0 0
        %483 = vmatpush2.bf16.msra.mxu0 0
        %484 = vmatprep.subr.bf16.mxu0 0
        %485 = vmatpush2.bf16.msra.mxu0 0
        %486 = vmatprep.mubr.bf16.mxu0 0
        %487 = vmatmul.mubr.bf16.gmra.mxu0 %v452
        %v488 = vpop.f32.mrf.mxu0
        %v489 = vadd.f32 0.0, %v488
        %v490 = vpop.f32.mrf.mxu0
        %v491 = vpop.f32.mrf.mxu0
        %v492 = vpop.f32.mrf.mxu0
        %493 = vdwg.mxu0
        %v494 = vmul.f32 %v409, %v415
        %v495 = vmul.f32 %v489, %v417
        %v496 = vadd.f32 %v494, %v495
        %v497 = vmul.f32 %v496, 0.25
        %v498 = vld [vmem:[%s4] sm:$0xff]
        %v499 = vld [vmem:[%s4 + $0x8] sm:$0xff]
        %v500 = vld [vmem:[%s5] sm:$0xff]
        %v501 = vld [vmem:[%s5 + $0x8] sm:$0xff]
        %vm502 = vcmask 261120
        %v504 = vsel %vm502, %v360, 0
        %506 = vmatprep.subr.bf16.mxu0 0
        %507 = vmatpush1.bf16.msra.mxu0 0
        %508 = vmatprep.subr.bf16.mxu0 0
        %509 = vmatpush1.bf16.msra.mxu0 0
        %510 = vmatprep.subr.bf16.mxu0 0
        %511 = vmatpush1.bf16.msra.mxu0 0
        %512 = vmatprep.subr.bf16.mxu0 0
        %513 = vmatpush1.bf16.msra.mxu0 0
        %514 = vmatprep.subr.bf16.mxu0 0
        %515 = vmatpush1.bf16.msra.mxu0 0
        %516 = vmatprep.subr.bf16.mxu0 0
        %517 = vmatpush1.bf16.msra.mxu0 0
        %518 = vmatprep.subr.bf16.mxu0 0
        %519 = vmatpush1.bf16.msra.mxu0 %v444
        %520 = vmatprep.subr.bf16.mxu0 0
        %521 = vmatpush1.bf16.msra.mxu0 %v443
        %522 = vmatprep.subr.bf16.mxu0 0
        %523 = vmatpush2.bf16.msra.mxu0 0
        %524 = vmatprep.subr.bf16.mxu0 0
        %525 = vmatpush2.bf16.msra.mxu0 0
        %526 = vmatprep.subr.bf16.mxu0 0
        %527 = vmatpush2.bf16.msra.mxu0 0
        %528 = vmatprep.subr.bf16.mxu0 0
        %529 = vmatpush2.bf16.msra.mxu0 0
        %530 = vmatprep.subr.bf16.mxu0 0
        %531 = vmatpush2.bf16.msra.mxu0 0
        %532 = vmatprep.subr.bf16.mxu0 0
        %533 = vmatpush2.bf16.msra.mxu0 0
        %534 = vmatprep.subr.bf16.mxu0 0
        %535 = vmatpush2.bf16.msra.mxu0 0
        %536 = vmatprep.subr.bf16.mxu0 0
        %537 = vmatpush2.bf16.msra.mxu0 0
        %538 = vmatprep.mubr.bf16.mxu0 0
        %539 = vmatmul.mubr.bf16.gmra.mxu0 %v504
        %v540 = vpop.f32.mrf.mxu0
        %v541 = vadd.f32 0.0, %v540
        %v542 = vpop.f32.mrf.mxu0
        %v543 = vpop.f32.mrf.mxu0
        %v544 = vadd.f32 0.0, %v543
        %v545 = vpop.f32.mrf.mxu0
        %546 = vdwg.mxu0
        %v547 = vmul.f32 %v354, %v498
        %v548 = vmul.f32 %v357, %v499
        %v549 = vmul.f32 %v541, %v500
        %v550 = vmul.f32 %v544, %v501
        %v551 = vadd.f32 %v547, %v549
        %v552 = vadd.f32 %v548, %v550
        %v553 = vpack.c.bf16 %v552, %v551
        %v554 = vlaneseq
        %v555 = vshrl.u32 %v554, 7
        %v556 = vadd.s32 %v555, 8
        %v557 = vlaneseq
        %v558 = vand.u32 %v557, 127
        %v559 = vand.u32 %v555, 7
        %v560 = vand.u32 %v556, 7
        %v561 = vstv %s258
        %v562 = vadd.s32 %v559, %v561
        %v563 = vadd.s32 %v560, %v561
        %vm564 = vcmp.le.s32.totalorder %v558, %v562
        %vm565 = vcmp.le.s32.totalorder %v558, %v563
        %567 = vrot.lane.b32.xlu0 %v497, 112
        %v568 = vpop.permute.xlu0 %567
        %v570 = vpack.c.bf16 %v568, %v497
        %vm571 = vcmask 130048
        %v573 = vsel %vm571, %v570, 0
        %v576 = vsel %vm571, %v553, 0
        %578 = vmatprep.subr.bf16.mxu0 0
        %579 = vmatpush1.bf16.xpose.msra.mxu0 0
        %580 = vmatprep.subr.bf16.mxu0 0
        %581 = vmatpush1.bf16.xpose.msra.mxu0 0
        %582 = vmatprep.subr.bf16.mxu0 0
        %583 = vmatpush1.bf16.xpose.msra.mxu0 0
        %584 = vmatprep.subr.bf16.mxu0 0
        %585 = vmatpush1.bf16.xpose.msra.mxu0 0
        %586 = vmatprep.subr.bf16.mxu0 0
        %587 = vmatpush1.bf16.xpose.msra.mxu0 0
        %588 = vmatprep.subr.bf16.mxu0 0
        %589 = vmatpush1.bf16.xpose.msra.mxu0 0
        %590 = vmatprep.subr.bf16.mxu0 0
        %591 = vmatpush1.bf16.xpose.msra.mxu0 0
        %592 = vmatprep.subr.bf16.mxu0 0
        %593 = vmatpush1.bf16.xpose.msra.mxu0 %v576
        %594 = vmatprep.subr.bf16.mxu0 0
        %595 = vmatpush2.bf16.xpose.msra.mxu0 0
        %596 = vmatprep.subr.bf16.mxu0 0
        %597 = vmatpush2.bf16.xpose.msra.mxu0 0
        %598 = vmatprep.subr.bf16.mxu0 0
        %599 = vmatpush2.bf16.xpose.msra.mxu0 0
        %600 = vmatprep.subr.bf16.mxu0 0
        %601 = vmatpush2.bf16.xpose.msra.mxu0 0
        %602 = vmatprep.subr.bf16.mxu0 0
        %603 = vmatpush2.bf16.xpose.msra.mxu0 0
        %604 = vmatprep.subr.bf16.mxu0 0
        %605 = vmatpush2.bf16.xpose.msra.mxu0 0
        %606 = vmatprep.subr.bf16.mxu0 0
        %607 = vmatpush2.bf16.xpose.msra.mxu0 0
        %608 = vmatprep.subr.bf16.mxu0 0
        %609 = vmatpush2.bf16.xpose.msra.mxu0 0
        %610 = vmatprep.mubr.bf16.mxu0 0
        %611 = vmatmul.mubr.bf16.gmra.mxu0 %v573
        %v612 = vpop.f32.mrf.mxu0
        %v613 = vadd.f32 0.0, %v612
        %v614 = vpop.f32.mrf.mxu0
        %v615 = vpop.f32.mrf.mxu0
        %v616 = vadd.f32 0.0, %v615
        %v617 = vpop.f32.mrf.mxu0
        %618 = vdwg.mxu0
        %v619 = vsel %vm564, %v613, -1e+30
        %v620 = vsel %vm565, %v616, -1e+30
        %v621 = vsel %vm571, %v619, -inf
        %622 = vmax.xlane.f32.xlu0 %v621
        %v623 = vpop.xlane.xlu0 %622
        %v624 = vsel %vm571, %v620, -inf
        %625 = vmax.xlane.f32.xlu0 %v624
        %v626 = vpop.xlane.xlu0 %625
        %v627 = vsub.f32 %v619, %v623
        %v628 = vsub.f32 %v620, %v626
        %v629 = vmul.f32 %v627, 1.442695
        %v630 = vpow.pop %v629
        %v631 = vmul.f32 %v628, 1.442695
        %v632 = vpow.pop %v631
        %v633 = vsel %vm571, %v630, 0.0
        %634 = vadd.xlane.f32.xlu0 %v633
        %v635 = vpop.xlane.xlu0 %634
        %v636 = vsel %vm571, %v632, 0.0
        %637 = vadd.xlane.f32.xlu0 %v636
        %v638 = vpop.xlane.xlu0 %637
        %v639 = vpack.c.bf16 %v632, %v630
        %641 = vrot.lane.b32.xlu0 %v360, 96
        %v642 = vpop.permute.xlu0 %641
        %v645 = vsel %vm571, %v639, 0
        %647 = vmatprep.subr.bf16.mxu0 0
        %648 = vmatpush1.bf16.msra.mxu0 0
        %649 = vmatprep.subr.bf16.mxu0 0
        %650 = vmatpush1.bf16.msra.mxu0 0
        %651 = vmatprep.subr.bf16.mxu0 0
        %652 = vmatpush1.bf16.msra.mxu0 0
        %653 = vmatprep.subr.bf16.mxu0 0
        %654 = vmatpush1.bf16.msra.mxu0 0
        %655 = vmatprep.subr.bf16.mxu0 0
        %656 = vmatpush1.bf16.msra.mxu0 0
        %657 = vmatprep.subr.bf16.mxu0 0
        %658 = vmatpush1.bf16.msra.mxu0 0
        %659 = vmatprep.subr.bf16.mxu0 0
        %660 = vmatpush1.bf16.msra.mxu0 0
        %661 = vmatprep.subr.bf16.mxu0 0
        %662 = vmatpush1.bf16.msra.mxu0 %v642
        %663 = vmatprep.subr.bf16.mxu0 0
        %664 = vmatpush2.bf16.msra.mxu0 0
        %665 = vmatprep.subr.bf16.mxu0 0
        %666 = vmatpush2.bf16.msra.mxu0 0
        %667 = vmatprep.subr.bf16.mxu0 0
        %668 = vmatpush2.bf16.msra.mxu0 0
        %669 = vmatprep.subr.bf16.mxu0 0
        %670 = vmatpush2.bf16.msra.mxu0 0
        %671 = vmatprep.subr.bf16.mxu0 0
        %672 = vmatpush2.bf16.msra.mxu0 0
        %673 = vmatprep.subr.bf16.mxu0 0
        %674 = vmatpush2.bf16.msra.mxu0 0
        %675 = vmatprep.subr.bf16.mxu0 0
        %676 = vmatpush2.bf16.msra.mxu0 0
        %677 = vmatprep.subr.bf16.mxu0 0
        %678 = vmatpush2.bf16.msra.mxu0 0
        %679 = vmatprep.mubr.bf16.mxu0 0
        %680 = vmatmul.mubr.bf16.gmra.mxu0 %v645
        %v681 = vpop.f32.mrf.mxu0
        %v682 = vadd.f32 0.0, %v681
        %v683 = vpop.f32.mrf.mxu0
        %v684 = vpop.f32.mrf.mxu0
        %v685 = vadd.f32 0.0, %v684
        %v686 = vpop.f32.mrf.mxu0
        %687 = vdwg.mxu0
        %v688 = vrcp.pop %v635
        %v689 = vrcp.pop %v638
        %v690 = vmul.f32 %v682, %v688
        %v691 = vmul.f32 %v685, %v689
        %692 = vst.msk [vmem:[#allocation2] sm:$0xff] %vm571, %v690
        %694 = vrot.lane.b32.xlu0 %v691, 16
        %v695 = vpop.permute.xlu0 %694
        %vm697 = vcmask 261248
        %698 = vst.msk [vmem:[#allocation2] sm:$0xff] %vm697, %v695
        %700 = vrot.lane.b32.xlu0 %v570, 96
        %v701 = vpop.permute.xlu0 %700
        %703 = vrot.lane.b32.xlu0 %v553, 112
        %v704 = vpop.permute.xlu0 %703
        %v706 = vsel %vm571, %v701, 0
        %v709 = vsel %vm571, %v704, 0
        %711 = vmatprep.subr.bf16.mxu0 0
        %712 = vmatpush1.bf16.xpose.msra.mxu0 0
        %713 = vmatprep.subr.bf16.mxu0 0
        %714 = vmatpush1.bf16.xpose.msra.mxu0 0
        %715 = vmatprep.subr.bf16.mxu0 0
        %716 = vmatpush1.bf16.xpose.msra.mxu0 0
        %717 = vmatprep.subr.bf16.mxu0 0
        %718 = vmatpush1.bf16.xpose.msra.mxu0 0
        %719 = vmatprep.subr.bf16.mxu0 0
        %720 = vmatpush1.bf16.xpose.msra.mxu0 0
        %721 = vmatprep.subr.bf16.mxu0 0
        %722 = vmatpush1.bf16.xpose.msra.mxu0 0
        %723 = vmatprep.subr.bf16.mxu0 0
        %724 = vmatpush1.bf16.xpose.msra.mxu0 0
        %725 = vmatprep.subr.bf16.mxu0 0
        %726 = vmatpush1.bf16.xpose.msra.mxu0 %v709
        %727 = vmatprep.subr.bf16.mxu0 0
        %728 = vmatpush2.bf16.xpose.msra.mxu0 0
        %729 = vmatprep.subr.bf16.mxu0 0
        %730 = vmatpush2.bf16.xpose.msra.mxu0 0
        %731 = vmatprep.subr.bf16.mxu0 0
        %732 = vmatpush2.bf16.xpose.msra.mxu0 0
        %733 = vmatprep.subr.bf16.mxu0 0
        %734 = vmatpush2.bf16.xpose.msra.mxu0 0
        %735 = vmatprep.subr.bf16.mxu0 0
        %736 = vmatpush2.bf16.xpose.msra.mxu0 0
        %737 = vmatprep.subr.bf16.mxu0 0
        %738 = vmatpush2.bf16.xpose.msra.mxu0 0
        %739 = vmatprep.subr.bf16.mxu0 0
        %740 = vmatpush2.bf16.xpose.msra.mxu0 0
        %741 = vmatprep.subr.bf16.mxu0 0
        %742 = vmatpush2.bf16.xpose.msra.mxu0 0
        %743 = vmatprep.mubr.bf16.mxu0 0
        %744 = vmatmul.mubr.bf16.gmra.mxu0 %v706
        %v745 = vpop.f32.mrf.mxu0
        %v746 = vadd.f32 0.0, %v745
        %v747 = vpop.f32.mrf.mxu0
        %v748 = vpop.f32.mrf.mxu0
        %v749 = vadd.f32 0.0, %v748
        %v750 = vpop.f32.mrf.mxu0
        %751 = vdwg.mxu0
        %v752 = vsel %vm564, %v746, -1e+30
        %v753 = vsel %vm565, %v749, -1e+30
        %v754 = vsel %vm571, %v752, -inf
        %755 = vmax.xlane.f32.xlu0 %v754
        %v756 = vpop.xlane.xlu0 %755
        %v757 = vsel %vm571, %v753, -inf
        %758 = vmax.xlane.f32.xlu0 %v757
        %v759 = vpop.xlane.xlu0 %758
        %v760 = vsub.f32 %v752, %v756
        %v761 = vsub.f32 %v753, %v759
        %v762 = vmul.f32 %v760, 1.442695
        %v763 = vpow.pop %v762
        %v764 = vmul.f32 %v761, 1.442695
        %v765 = vpow.pop %v764
        %v766 = vsel %vm571, %v763, 0.0
        %767 = vadd.xlane.f32.xlu0 %v766
        %v768 = vpop.xlane.xlu0 %767
        %v769 = vsel %vm571, %v765, 0.0
        %770 = vadd.xlane.f32.xlu0 %v769
        %v771 = vpop.xlane.xlu0 %770
        %v772 = vpack.c.bf16 %v765, %v763
        %773 = vrot.lane.b32.xlu0 %v360, 80
        %v774 = vpop.permute.xlu0 %773
        %v777 = vsel %vm571, %v772, 0
        %779 = vmatprep.subr.bf16.mxu0 0
        %780 = vmatpush1.bf16.msra.mxu0 0
        %781 = vmatprep.subr.bf16.mxu0 0
        %782 = vmatpush1.bf16.msra.mxu0 0
        %783 = vmatprep.subr.bf16.mxu0 0
        %784 = vmatpush1.bf16.msra.mxu0 0
        %785 = vmatprep.subr.bf16.mxu0 0
        %786 = vmatpush1.bf16.msra.mxu0 0
        %787 = vmatprep.subr.bf16.mxu0 0
        %788 = vmatpush1.bf16.msra.mxu0 0
        %789 = vmatprep.subr.bf16.mxu0 0
        %790 = vmatpush1.bf16.msra.mxu0 0
        %791 = vmatprep.subr.bf16.mxu0 0
        %792 = vmatpush1.bf16.msra.mxu0 0
        %793 = vmatprep.subr.bf16.mxu0 0
        %794 = vmatpush1.bf16.msra.mxu0 %v774
        %795 = vmatprep.subr.bf16.mxu0 0
        %796 = vmatpush2.bf16.msra.mxu0 0
        %797 = vmatprep.subr.bf16.mxu0 0
        %798 = vmatpush2.bf16.msra.mxu0 0
        %799 = vmatprep.subr.bf16.mxu0 0
        %800 = vmatpush2.bf16.msra.mxu0 0
        %801 = vmatprep.subr.bf16.mxu0 0
        %802 = vmatpush2.bf16.msra.mxu0 0
        %803 = vmatprep.subr.bf16.mxu0 0
        %804 = vmatpush2.bf16.msra.mxu0 0
        %805 = vmatprep.subr.bf16.mxu0 0
        %806 = vmatpush2.bf16.msra.mxu0 0
        %807 = vmatprep.subr.bf16.mxu0 0
        %808 = vmatpush2.bf16.msra.mxu0 0
        %809 = vmatprep.subr.bf16.mxu0 0
        %810 = vmatpush2.bf16.msra.mxu0 0
        %811 = vmatprep.mubr.bf16.mxu0 0
        %812 = vmatmul.mubr.bf16.gmra.mxu0 %v777
        %v813 = vpop.f32.mrf.mxu0
        %v814 = vadd.f32 0.0, %v813
        %v815 = vpop.f32.mrf.mxu0
        %v816 = vpop.f32.mrf.mxu0
        %v817 = vadd.f32 0.0, %v816
        %v818 = vpop.f32.mrf.mxu0
        %819 = vdwg.mxu0
        %v820 = vrcp.pop %v768
        %v821 = vrcp.pop %v771
        %v822 = vmul.f32 %v814, %v820
        %v823 = vmul.f32 %v817, %v821
        %825 = vrot.lane.b32.xlu0 %v822, 32
        %v826 = vpop.permute.xlu0 %825
        %vm828 = vcmask 392448
        %829 = vst.msk [vmem:[#allocation2] sm:$0xff] %vm828, %v826
        %831 = vrot.lane.b32.xlu0 %v823, 48
        %v832 = vpop.permute.xlu0 %831
        %vm834 = vcmask 523648
        %835 = vst.msk [vmem:[#allocation2] sm:$0xff] %vm834, %v832
        %v836 = vld [vmem:[#allocation2] sm:$0xff]
        %v837 = vpack.c.bf16 %v836, %v836
        %v838 = vld [vmem:[%s6] sm:$0xf]
        %v839 = vld [vmem:[%s6 + $0x4] sm:$0xf]
        %v840 = vld [vmem:[%s6 + $0x8] sm:$0xf]
        %v841 = vld [vmem:[%s6 + $0xc] sm:$0xf]
        %v842 = vld [vmem:[%s6 + $0x10] sm:$0xf]
        %v843 = vld [vmem:[%s6 + $0x14] sm:$0xf]
        %v844 = vld [vmem:[%s6 + $0x18] sm:$0xf]
        %v845 = vld [vmem:[%s6 + $0x1c] sm:$0xf]
        %v854 = vunpack.c.l.b16 %v838
        %v855 = vunpack.c.l.b16 %v839
        %v856 = vunpack.c.l.b16 %v840
        %v857 = vunpack.c.l.b16 %v841
        %v858 = vunpack.c.l.b16 %v842
        %v859 = vunpack.c.l.b16 %v843
        %v860 = vunpack.c.l.b16 %v844
        %v861 = vunpack.c.l.b16 %v845
        %v862 = vpack.c.b16 %v855, %v854
        %v863 = vpack.c.b16 %v857, %v856
        %v864 = vpack.c.b16 %v859, %v858
        %v865 = vpack.c.b16 %v861, %v860
        %v871 = vsel %vm315, %v837, 0
        %873 = vmatprep.subr.bf16.mxu0 0
        %874 = vmatpush1.bf16.msra.mxu0 0
        %875 = vmatprep.subr.bf16.mxu0 0
        %876 = vmatpush1.bf16.msra.mxu0 0
        %877 = vmatprep.subr.bf16.mxu0 0
        %878 = vmatpush1.bf16.msra.mxu0 0
        %879 = vmatprep.subr.bf16.mxu0 0
        %880 = vmatpush1.bf16.msra.mxu0 0
        %881 = vmatprep.subr.bf16.mxu0 0
        %882 = vmatpush1.bf16.msra.mxu0 %v865
        %883 = vmatprep.subr.bf16.mxu0 0
        %884 = vmatpush1.bf16.msra.mxu0 %v864
        %885 = vmatprep.subr.bf16.mxu0 0
        %886 = vmatpush1.bf16.msra.mxu0 %v863
        %887 = vmatprep.subr.bf16.mxu0 0
        %888 = vmatpush1.bf16.msra.mxu0 %v862
        %889 = vmatprep.subr.bf16.mxu0 0
        %890 = vmatpush2.bf16.msra.mxu0 0
        %891 = vmatprep.subr.bf16.mxu0 0
        %892 = vmatpush2.bf16.msra.mxu0 0
        %893 = vmatprep.subr.bf16.mxu0 0
        %894 = vmatpush2.bf16.msra.mxu0 0
        %895 = vmatprep.subr.bf16.mxu0 0
        %896 = vmatpush2.bf16.msra.mxu0 0
        %897 = vmatprep.subr.bf16.mxu0 0
        %898 = vmatpush2.bf16.msra.mxu0 0
        %899 = vmatprep.subr.bf16.mxu0 0
        %900 = vmatpush2.bf16.msra.mxu0 0
        %901 = vmatprep.subr.bf16.mxu0 0
        %902 = vmatpush2.bf16.msra.mxu0 0
        %903 = vmatprep.subr.bf16.mxu0 0
        %904 = vmatpush2.bf16.msra.mxu0 0
        %905 = vmatprep.mubr.bf16.mxu0 0
        %906 = vmatmul.mubr.bf16.gmra.mxu0 %v871
        %v907 = vpop.f32.mrf.mxu0
        %v908 = vadd.f32 0.0, %v907
        %v909 = vpop.f32.mrf.mxu0
        %v910 = vpop.f32.mrf.mxu0
        %v911 = vpop.f32.mrf.mxu0
        %912 = vdwg.mxu0
        %913 = vst.msk [vmem:[%s256] sm:$0xff] %vm315, %v908
        %s914 = sand.u32 %s176, 1
        %s915 = scalar_lea.sflag [#allocation4], %s914
        %s916 = sand.u32 %s176, 1
        %s917 = smul.addr %s916, 8
        %s918 = scalar_lea.vmem [#allocation3], %s917
        // Predicated region
        $region49: #{glm_attention.1} parent=47 // pred_check
          %p919 = pneg %p186
        $region50: #{glm_attention.1} parent=47 // pred_check_branch
          %921 = sbr.rel (%p919) target = $region52
        $region51: #{glm_attention.1} parent=47 // pred_region
          %s923 = ssub.s32 128, 128
          %924 = vsyncadd %s915, %s923
          %s925 = smul.addr %s21, 128
          %s926 = scalar_lea.hbm %s7, %s925
          %s928 = sshll.u32 %s918, 4
          %s929 = int_to_ptr.vmem [resolvable:$true] %s928
          %931 = dma.vmem_to_hbm [thread:$0]  %s929, 128, %s926, %s915
        $region52: #{glm_attention.1} parent=47 // pred_fallthru
          _
      $region48: #{glm_attention.1} parent=5 // pred_fallthru
        _
      %p932 = scmp.le.s32.totalorder 2, %s16
      // Predicated region
      $region53: #{glm_attention.1} parent=5 // pred_check
        %p933 = pneg %p932
      $region54: #{glm_attention.1} parent=5 // pred_check_branch
        %935 = sbr.rel (%p933) target = $region56
      $region55: #{glm_attention.1} parent=5 // pred_region
        %s936 = ssub.s32 %s16, 2
        // Predicated region
        $region57: #{glm_attention.1} parent=55 // pred_check
          %p937 = pneg %p192
        $region58: #{glm_attention.1} parent=55 // pred_check_branch
          %939 = sbr.rel (%p937) target = $region60
        $region59: #{glm_attention.1} parent=55 // pred_region
          %s940 = sand.u32 %s177, 1
          %s941 = scalar_lea.sflag [#allocation4], %s940
          %s942 = sand.u32 %s177, 1
          %s943 = smul.addr %s942, 8
          %s944 = scalar_lea.vmem [#allocation3], %s943
          %945 = dma.done %s941, 128
        $region60: #{glm_attention.1} parent=55 // pred_fallthru
          _
      $region56: #{glm_attention.1} parent=5 // pred_fallthru
        _
    $region6: #{glm_attention.1} parent=1 // loop_footer
      %s20 = sadd.s32 1, %s16
    $region7: #{glm_attention.1} parent=1 // loop_footer_branch
      %15 = sbr.rel target = $region3
    $region8: #{glm_attention.1} parent=1 // loop_exit
      _
    %946 = vsyncpa [#allocation4], 1
    %s947 = scalar_lea.sflag [#allocation4], 1
    %948 = vsyncpa %s947, 1

</llo_original>
